<compile_context>
chip_gen: v7x
topology: tpu7x:2x2x1
jax: 0.10.0
libtpu: 0.0.40
codegen_flags: <defaults>
</compile_context>

<pallas_src>
import numpy as np
import jax
import jax.numpy as jnp
from jax.experimental import pallas as pl
from jax.experimental.pallas import tpu as pltpu


def _sigmoid(v):
    # explicit form (exp goes to the EUP slot); numerics well within 1e-3 tolerance
    return 1.0 / (1.0 + jnp.exp(-v))


def _cbam_kernel(x_ref, w1_ref, w2_ref, kta_ref, ktm_ref, o_ref):
    # x_ref  : (C, HW)   one image; channels on sublanes, pixels on lanes (lane-dense)
    # w1_ref : (Chid, C) ChannelAttention.fc1 (1x1 conv) weights
    # w2_ref : (C, Chid) ChannelAttention.fc2 (1x1 conv) weights
    # kta_ref: (HW, HW)  transposed dense operator of the 3x3 spatial conv, avg channel
    # ktm_ref: (HW, HW)  same for the max channel (zero padding baked in)
    # o_ref  : (C, HW)
    x = x_ref[...]
    C, HW = x.shape

    # ---- channel attention: global avg/max pool over H*W + shared 2-layer MLP ----
    avg_p = jnp.sum(x, axis=1, keepdims=True) * (1.0 / HW)   # (C, 1)  lane reduce
    max_p = jnp.max(x, axis=1, keepdims=True)                # (C, 1)
    w1 = w1_ref[...]
    w2 = w2_ref[...]

    def mlp(p):                                              # (C,1) -> (C,1)
        h = jnp.maximum(jnp.dot(w1, p, preferred_element_type=jnp.float32), 0.0)
        return jnp.dot(w2, h, preferred_element_type=jnp.float32)

    ca = _sigmoid(mlp(avg_p) + mlp(max_p))                   # (C, 1)
    x1 = x * ca                                              # broadcast along lanes

    # ---- spatial attention: channel mean/max + 3x3 conv as ONE matmul per map ----
    avg_c = jnp.sum(x1, axis=0, keepdims=True) * (1.0 / C)   # (1, HW) sublane reduce
    max_c = jnp.max(x1, axis=0, keepdims=True)               # (1, HW)
    s = (jnp.dot(avg_c, kta_ref[...], preferred_element_type=jnp.float32)
         + jnp.dot(max_c, ktm_ref[...], preferred_element_type=jnp.float32))
    sa = _sigmoid(s)                                         # (1, HW)

    o_ref[...] = (x1 * sa).astype(o_ref.dtype)               # lane-dense store


def cbam_forward(x_nchw, kp):
    """x_nchw: (N, C, H, W) float32 -> (N, C, H, W) float32."""
    N, C, H, W = x_nchw.shape
    HW = H * W
    Chid = kp["w1"].shape[0]
    x2 = x_nchw.reshape(N, C, HW).astype(jnp.float32)        # free reshape, no transpose

    flops = int(N * (4 * HW * HW + 12 * HW * C + 8 * C * Chid))
    transcendentals = int(N * (C + HW))
    bytes_accessed = int(4 * (2 * N * C * HW + 2 * HW * HW + 2 * C * Chid))

    out = pl.pallas_call(
        _cbam_kernel,
        out_shape=jax.ShapeDtypeStruct((N, C, HW), jnp.float32),
        grid=(N,),
        in_specs=[
            pl.BlockSpec((None, C, HW), lambda n: (n, 0, 0)),   # per-image block
            pl.BlockSpec((Chid, C), lambda n: (0, 0)),
            pl.BlockSpec((C, Chid), lambda n: (0, 0)),
            pl.BlockSpec((HW, HW), lambda n: (0, 0)),
            pl.BlockSpec((HW, HW), lambda n: (0, 0)),
        ],
        out_specs=pl.BlockSpec((None, C, HW), lambda n: (n, 0, 0)),
        compiler_params=pltpu.CompilerParams(
            dimension_semantics=("parallel",),                  # 2-TC sharding on v7x
            vmem_limit_bytes=32 * 1024 * 1024,
        ),
        cost_estimate=pl.CostEstimate(
            flops=flops, transcendentals=transcendentals,
            bytes_accessed=bytes_accessed),
    )(x2, kp["w1"], kp["w2"], kp["kta"], kp["ktm"])
    return out.reshape(N, C, H, W)


def _conv3x3_as_matrix(w33, H, W):
    """Dense (H*W, H*W) operator for a 3x3 'same' (zero-pad) conv: out = K @ vec(in)."""
    K = np.zeros((H * W, H * W), np.float32)
    for h in range(H):
        for w in range(W):
            p = h * W + w
            for kh in range(3):
                for kw in range(3):
                    hh, ww = h + kh - 1, w + kw - 1
                    if 0 <= hh < H and 0 <= ww < W:
                        K[p, hh * W + ww] = w33[kh, kw]
    return K


def make_params(key, C, H, W):
    Chid = max(C // 16, 1)   # CBAM hard-codes ratio 16 -> hidden = C // 16
    k1, k2, k3 = jax.random.split(key, 3)
    raw = {
        "w1": 0.3 * jax.random.normal(k1, (Chid, C, 1, 1), jnp.float32),   # fc1, OIHW
        "w2": 0.3 * jax.random.normal(k2, (C, Chid, 1, 1), jnp.float32),   # fc2, OIHW
        "wsp": 0.3 * jax.random.normal(k3, (1, 2, 3, 3), jnp.float32),     # spatial conv, in=(avg,max)
    }
    wsp_np = np.asarray(raw["wsp"])
    kp = {
        "w1": raw["w1"][:, :, 0, 0],                                       # (Chid, C)
        "w2": raw["w2"][:, :, 0, 0],                                       # (C, Chid)
        "kta": jnp.asarray(_conv3x3_as_matrix(wsp_np[0, 0], H, W).T),      # (HW, HW)
        "ktm": jnp.asarray(_conv3x3_as_matrix(wsp_np[0, 1], H, W).T),      # (HW, HW)
    }
    return raw, kp


def ref_forward(x, raw):
    """Plain-JAX reference for CBAM.forward (eval mode)."""
    w1 = raw["w1"][:, :, 0, 0]       # (Chid, C)
    w2 = raw["w2"][:, :, 0, 0]       # (C, Chid)
    avg = jnp.mean(x, axis=(2, 3))   # (N, C)
    mx = jnp.max(x, axis=(2, 3))     # (N, C)

    def mlp(p):
        h = jnp.maximum(p @ w1.T, 0.0)
        return h @ w2.T

    ca = jax.nn.sigmoid(mlp(avg) + mlp(mx))[:, :, None, None]
    x1 = ca * x
    avg_c = jnp.mean(x1, axis=1, keepdims=True)
    max_c = jnp.max(x1, axis=1, keepdims=True)
    cat = jnp.concatenate([avg_c, max_c], axis=1)            # (N, 2, H, W)
    s = jax.lax.conv_general_dilated(
        cat, raw["wsp"], window_strides=(1, 1), padding=((1, 1), (1, 1)),
        dimension_numbers=("NCHW", "OIHW", "NCHW"))
    sa = jax.nn.sigmoid(s)
    return sa * x1


if __name__ == "__main__":
    key = jax.random.PRNGKey(0)
    k_x, k_p = jax.random.split(key)

    N, C, H, W = 2, 32, 16, 16   # CBAM default in_channels=32 (ratio 16 -> hidden 2)
    x = jax.random.normal(k_x, (N, C, H, W), dtype=jnp.float32)
    raw, kparams = make_params(k_p, C, H, W)

    out = jax.block_until_ready(cbam_forward(x, kparams))
    ref = jax.block_until_ready(ref_forward(x, raw))
    np.testing.assert_allclose(np.asarray(out), np.asarray(ref), rtol=1e-3, atol=1e-3)

    print("KERNEL_OK")
</pallas_src>

<mosaic_0001>
module attributes {stable_mosaic.version = 11 : i64} {
  func.func @_cbam_kernel(%arg0: i32, %arg1: memref<1x32x256xf32, #tpu.memory_space<vmem>>, %arg2: memref<2x32xf32, #tpu.memory_space<vmem>>, %arg3: memref<32x2xf32, #tpu.memory_space<vmem>>, %arg4: memref<256x256xf32, #tpu.memory_space<vmem>>, %arg5: memref<256x256xf32, #tpu.memory_space<vmem>>, %arg6: memref<1x32x256xf32, #tpu.memory_space<vmem>>) attributes {dimension_semantics = [#tpu.dimension_semantics<parallel>], iteration_bounds = array<i64: 2>, scalar_prefetch = 0 : i64, scratch_operands = 0 : i64, tpu.core_type = #tpu.core_type<tc>, window_params = [{transform_indices = @transform_0, window_bounds = array<i64: 1, 32, 256>}, {pipeline_mode = #tpu.pipeline_mode<synchronous>, transform_indices = @transform_1, window_bounds = array<i64: 2, 32>}, {pipeline_mode = #tpu.pipeline_mode<synchronous>, transform_indices = @transform_2, window_bounds = array<i64: 32, 2>}, {pipeline_mode = #tpu.pipeline_mode<synchronous>, transform_indices = @transform_3, window_bounds = array<i64: 256, 256>}, {pipeline_mode = #tpu.pipeline_mode<synchronous>, transform_indices = @transform_4, window_bounds = array<i64: 256, 256>}, {transform_indices = @transform_5, window_bounds = array<i64: 1, 32, 256>}]} {
    %c0 = arith.constant 0 : index
    %c0_0 = arith.constant 0 : index
    %c0_1 = arith.constant 0 : index
    %0 = vector.load %arg1[%c0, %c0_0, %c0_1] : memref<1x32x256xf32, #tpu.memory_space<vmem>>, vector<1x32x256xf32>
    %1 = vector.shape_cast %0 : vector<1x32x256xf32> to vector<32x256xf32>
    %cst = arith.constant dense<0.000000e+00> : vector<32xf32>
    %2 = vector.multi_reduction <add>, %1, %cst [1] : vector<32x256xf32> to vector<32xf32>
    %3 = vector.shape_cast %2 : vector<32xf32> to vector<32x1xf32>
    %cst_2 = arith.constant 3.906250e-03 : f32
    %4 = vector.broadcast %cst_2 : f32 to vector<32x1xf32>
    %5 = arith.mulf %3, %4 : vector<32x1xf32>
    %cst_3 = arith.constant dense<0xFF800000> : vector<32xf32>
    %6 = vector.multi_reduction <maximumf>, %1, %cst_3 [1] : vector<32x256xf32> to vector<32xf32>
    %7 = vector.shape_cast %6 : vector<32xf32> to vector<32x1xf32>
    %c0_4 = arith.constant 0 : index
    %c0_5 = arith.constant 0 : index
    %8 = vector.load %arg2[%c0_4, %c0_5] : memref<2x32xf32, #tpu.memory_space<vmem>>, vector<2x32xf32>
    %c0_6 = arith.constant 0 : index
    %c0_7 = arith.constant 0 : index
    %9 = vector.load %arg3[%c0_6, %c0_7] : memref<32x2xf32, #tpu.memory_space<vmem>>, vector<32x2xf32>
    %cst_8 = arith.constant dense<0.000000e+00> : vector<2x1xf32>
    %10 = tpu.matmul %8, %5, %cst_8 {dimension_numbers = #tpu.dot_dimension_numbers<[1], [0], [0], [1], [0, 0, 1, 1], [], []>} : vector<2x32xf32>, vector<32x1xf32>, vector<2x1xf32> -> vector<2x1xf32>
    %cst_9 = arith.constant 0.000000e+00 : f32
    %11 = vector.broadcast %cst_9 : f32 to vector<2x1xf32>
    %12 = arith.maximumf %10, %11 : vector<2x1xf32>
    %cst_10 = arith.constant dense<0.000000e+00> : vector<32x1xf32>
    %13 = tpu.matmul %9, %12, %cst_10 {dimension_numbers = #tpu.dot_dimension_numbers<[1], [0], [0], [1], [0, 0, 1, 1], [], []>} : vector<32x2xf32>, vector<2x1xf32>, vector<32x1xf32> -> vector<32x1xf32>
    %cst_11 = arith.constant dense<0.000000e+00> : vector<2x1xf32>
    %14 = tpu.matmul %8, %7, %cst_11 {dimension_numbers = #tpu.dot_dimension_numbers<[1], [0], [0], [1], [0, 0, 1, 1], [], []>} : vector<2x32xf32>, vector<32x1xf32>, vector<2x1xf32> -> vector<2x1xf32>
    %cst_12 = arith.constant 0.000000e+00 : f32
    %15 = vector.broadcast %cst_12 : f32 to vector<2x1xf32>
    %16 = arith.maximumf %14, %15 : vector<2x1xf32>
    %cst_13 = arith.constant dense<0.000000e+00> : vector<32x1xf32>
    %17 = tpu.matmul %9, %16, %cst_13 {dimension_numbers = #tpu.dot_dimension_numbers<[1], [0], [0], [1], [0, 0, 1, 1], [], []>} : vector<32x2xf32>, vector<2x1xf32>, vector<32x1xf32> -> vector<32x1xf32>
    %18 = arith.addf %13, %17 : vector<32x1xf32>
    %cst_14 = arith.constant 0.000000e+00 : f32
    %19 = vector.broadcast %cst_14 : f32 to vector<32x1xf32>
    %20 = arith.subf %19, %18 : vector<32x1xf32>
    %21 = math.exp %20 : vector<32x1xf32>
    %cst_15 = arith.constant 1.000000e+00 : f32
    %22 = vector.broadcast %cst_15 : f32 to vector<32x1xf32>
    %23 = arith.addf %22, %21 : vector<32x1xf32>
    %cst_16 = arith.constant 1.000000e+00 : f32
    %24 = vector.broadcast %cst_16 : f32 to vector<32x1xf32>
    %25 = arith.divf %24, %23 : vector<32x1xf32>
    %26 = vector.broadcast %25 : vector<32x1xf32> to vector<32x256xf32>
    %27 = arith.mulf %1, %26 : vector<32x256xf32>
    %cst_17 = arith.constant dense<0.000000e+00> : vector<256xf32>
    %28 = vector.multi_reduction <add>, %27, %cst_17 [0] : vector<32x256xf32> to vector<256xf32>
    %29 = vector.shape_cast %28 : vector<256xf32> to vector<1x256xf32>
    %cst_18 = arith.constant 3.125000e-02 : f32
    %30 = vector.broadcast %cst_18 : f32 to vector<1x256xf32>
    %31 = arith.mulf %29, %30 : vector<1x256xf32>
    %cst_19 = arith.constant dense<0xFF800000> : vector<256xf32>
    %32 = vector.multi_reduction <maximumf>, %27, %cst_19 [0] : vector<32x256xf32> to vector<256xf32>
    %33 = vector.shape_cast %32 : vector<256xf32> to vector<1x256xf32>
    %c0_20 = arith.constant 0 : index
    %c0_21 = arith.constant 0 : index
    %34 = vector.load %arg4[%c0_20, %c0_21] : memref<256x256xf32, #tpu.memory_space<vmem>>, vector<256x256xf32>
    %cst_22 = arith.constant dense<0.000000e+00> : vector<1x256xf32>
    %35 = tpu.matmul %31, %34, %cst_22 {dimension_numbers = #tpu.dot_dimension_numbers<[1], [0], [0], [1], [0, 0, 1, 1], [], []>} : vector<1x256xf32>, vector<256x256xf32>, vector<1x256xf32> -> vector<1x256xf32>
    %c0_23 = arith.constant 0 : index
    %c0_24 = arith.constant 0 : index
    %36 = vector.load %arg5[%c0_23, %c0_24] : memref<256x256xf32, #tpu.memory_space<vmem>>, vector<256x256xf32>
    %cst_25 = arith.constant dense<0.000000e+00> : vector<1x256xf32>
    %37 = tpu.matmul %33, %36, %cst_25 {dimension_numbers = #tpu.dot_dimension_numbers<[1], [0], [0], [1], [0, 0, 1, 1], [], []>} : vector<1x256xf32>, vector<256x256xf32>, vector<1x256xf32> -> vector<1x256xf32>
    %38 = arith.addf %35, %37 : vector<1x256xf32>
    %cst_26 = arith.constant 0.000000e+00 : f32
    %39 = vector.broadcast %cst_26 : f32 to vector<1x256xf32>
    %40 = arith.subf %39, %38 : vector<1x256xf32>
    %41 = math.exp %40 : vector<1x256xf32>
    %cst_27 = arith.constant 1.000000e+00 : f32
    %42 = vector.broadcast %cst_27 : f32 to vector<1x256xf32>
    %43 = arith.addf %42, %41 : vector<1x256xf32>
    %cst_28 = arith.constant 1.000000e+00 : f32
    %44 = vector.broadcast %cst_28 : f32 to vector<1x256xf32>
    %45 = arith.divf %44, %43 : vector<1x256xf32>
    %46 = vector.broadcast %45 : vector<1x256xf32> to vector<32x256xf32>
    %47 = arith.mulf %27, %46 : vector<32x256xf32>
    %c0_29 = arith.constant 0 : index
    %c0_30 = arith.constant 0 : index
    %c0_31 = arith.constant 0 : index
    %48 = vector.load %arg6[%c0_29, %c0_30, %c0_31] : memref<1x32x256xf32, #tpu.memory_space<vmem>>, vector<1x32x256xf32>
    %49 = vector.shape_cast %48 : vector<1x32x256xf32> to vector<32x256xf32>
    %50 = vector.shape_cast %47 : vector<32x256xf32> to vector<1x32x256xf32>
    tpu.vector_store %arg6[%c0_29, %c0_30, %c0_31], %50 {strides = array<i32>} : memref<1x32x256xf32, #tpu.memory_space<vmem>>, vector<1x32x256xf32>,
    return
  }
  func.func @transform_0(%arg0: i32) -> (i32, i32, i32) {
    %c0_i32 = arith.constant 0 : i32
    %c0_i32_0 = arith.constant 0 : i32
    %c0_i32_1 = arith.constant 0 : i32
    return %arg0, %c0_i32, %c0_i32_0 : i32, i32, i32
  }
  func.func @transform_1(%arg0: i32) -> (i32, i32) {
    %c0_i32 = arith.constant 0 : i32
    %c0_i32_0 = arith.constant 0 : i32
    %c0_i32_1 = arith.constant 0 : i32
    return %c0_i32, %c0_i32_0 : i32, i32
  }
  func.func @transform_2(%arg0: i32) -> (i32, i32) {
    %c0_i32 = arith.constant 0 : i32
    %c0_i32_0 = arith.constant 0 : i32
    %c0_i32_1 = arith.constant 0 : i32
    return %c0_i32, %c0_i32_0 : i32, i32
  }
  func.func @transform_3(%arg0: i32) -> (i32, i32) {
    %c0_i32 = arith.constant 0 : i32
    %c0_i32_0 = arith.constant 0 : i32
    %c0_i32_1 = arith.constant 0 : i32
    return %c0_i32, %c0_i32_0 : i32, i32
  }
  func.func @transform_4(%arg0: i32) -> (i32, i32) {
    %c0_i32 = arith.constant 0 : i32
    %c0_i32_0 = arith.constant 0 : i32
    %c0_i32_1 = arith.constant 0 : i32
    return %c0_i32, %c0_i32_0 : i32, i32
  }
  func.func @transform_5(%arg0: i32) -> (i32, i32, i32) {
    %c0_i32 = arith.constant 0 : i32
    %c0_i32_0 = arith.constant 0 : i32
    %c0_i32_1 = arith.constant 0 : i32
    return %arg0, %c0_i32, %c0_i32_0 : i32, i32, i32
  }
}

</mosaic_0001>

<llo_original>
// kernel: tpu_custom_call.1
$region0: #{tpu_custom_call.1}
  #allocation0 [shape = 'u32[]', space=smem, size = 0x4, offset = 0x4, fixed_abs, tag = 'smem constant byte address 0x4 - core index']
  #allocation1 [shape = 'u32[144,128]{1,0:T(1,128)}', space=vmem, size = 0x12000, scoped, tag = 'internal scratch']
  %s0 = inlined_call_operand.hbm [shape: f32[2,32,256], index: 0, kind: input, shape index: {}]
  %s1 = inlined_call_operand.vmem [shape: f32[2,32], index: 1, kind: input, shape index: {}]
  %s2 = inlined_call_operand.vmem [shape: f32[32,2], index: 2, kind: input, shape index: {}]
  %s3 = inlined_call_operand.hbm [shape: f32[256,256], index: 3, kind: input, shape index: {}]
  %s4 = inlined_call_operand.hbm [shape: f32[256,256], index: 4, kind: input, shape index: {}]
  %s5 = inlined_call_operand.hbm [shape: f32[2,32,256], index: 5, kind: output, shape index: {}]
  %s6 = sld [smem:[#allocation0]]
  $region65: #{tpu_custom_call.1} parent=0
    _
  %s8 = ssub.s32 1, %s6
  %s9 = scalar_select 0, %s8, %s6
  $region1: #{tpu_custom_call.1} parent=0
    #allocation2 [shape = 'u8[65536]{0}', space=vmem, size = 0x10000, scoped, tag = 'input window, operand 0']
    #allocation3 [shape = 's32[2]{0}', space=sflag, size = 0x8, scoped, tag = 'scoped memory for tpu_custom_call.1']
    #allocation4 [shape = 's32[2]{0}', space=sflag, size = 0x8, scoped, tag = 'scoped memory for tpu_custom_call.1']
    #allocation5 [shape = 'u8[262144]{0}', space=vmem, size = 0x40000, scoped, tag = 'input window, operand 3, single buffered']
    #allocation6 [shape = 's32[1]{0}', space=sflag, size = 0x4, scoped, tag = 'scoped memory for tpu_custom_call.1']
    #allocation7 [shape = 'u8[262144]{0}', space=vmem, size = 0x40000, scoped, tag = 'input window, operand 4, single buffered']
    #allocation8 [shape = 'u8[65536]{0}', space=vmem, size = 0x10000, scoped, tag = 'output window, operand 0']
    %10 = vsyncpa [#allocation3], 0
    %s11 = scalar_lea.sflag [#allocation3], 1
    %12 = vsyncpa %s11, 0
    %13 = vsyncpa [#allocation6], 0
    %14 = vsyncpa [#allocation4], 0
    %s15 = scalar_lea.sflag [#allocation4], 1
    %16 = vsyncpa %s15, 0
    loop: start=0, step=1, limit=4
    $region2: #{tpu_custom_call.1} parent=1 // loop_pre_header
      _
    $region3: #{tpu_custom_call.1} parent=1 // loop_header
      %s18 = sphi 0, %s22
      %p19 = scmp.ge.s32.totalorder %s18, 4
      %s28 = sphi 0, %s30
      %s31 = sphi 0, %s28
      %s32 = sphi 0, %s31
      %s48 = sphi 0, %s32
      %s52 = sphi 0, %s52
      %s54 = sphi 0, %s52
      %s55 = sphi 0, %s54
      %s69 = sphi 0, %s55
      %s73 = sphi 0, %s73
      %s75 = sphi 0, %s73
      %s76 = sphi 0, %s75
      %s90 = sphi 0, %s76
      %s94 = sphi 0, %s94
      %s96 = sphi 0, %s94
      %s97 = sphi 0, %s96
      %s111 = sphi 0, %s97
      %s115 = sphi 0, %s115
      %s117 = sphi 0, %s115
      %s118 = sphi 0, %s117
      %s132 = sphi 0, %s118
      %s138 = sphi 0, %s140
      %s141 = sphi 0, %s138
      %s142 = sphi 0, %s141
      %s158 = sphi 0, %s142
    $region4: #{tpu_custom_call.1} parent=1 // loop_header_branch
      %21 = sbr.rel (%p19) target = $region8
    $region5: #{tpu_custom_call.1} parent=1 // loop_body
      %s23 = ssub.s32 %s18, 1
      %s24 = ssub.s32 %s18, 2
      %s25 = sadd.s32 %s18, 1
      %s26 = ssub.s32 %s18, %s25
      %p27 = scmp.eq.s32.totalorder %s26, 0
      %s29 = sadd.s32 %s28, 1
      %s30 = scalar_select %p27, %s28, %s29
      %p33 = pneg %p27
      %p34 = scmp.eq.s32.totalorder %s18, 1
      %p35 = por %p33, %p34
      %p36 = scmp.ne.s32.totalorder %s28, %s31
      %p37 = scmp.eq.s32.totalorder %s18, 0
      %p38 = por %p36, %p37
      %p39 = scmp.ne.s32.totalorder %s28, %s31
      %p40 = scmp.eq.s32.totalorder %s23, 1
      %p41 = por %p39, %p40
      %p42 = scmp.ne.s32.totalorder %s31, %s32
      %p43 = scmp.eq.s32.totalorder %s23, 0
      %p44 = por %p42, %p43
      %p45 = scmp.ne.s32.totalorder %s31, %s32
      %p46 = scmp.eq.s32.totalorder %s24, 1
      %p47 = por %p45, %p46
      %p49 = scmp.ne.s32.totalorder %s32, %s48
      %p50 = scmp.eq.s32.totalorder %s24, 0
      %p51 = por %p49, %p50
      %s53 = sadd.s32 %s52, 1
      %p56 = scmp.eq.s32.totalorder %s18, 1
      %p57 = scmp.ne.s32.totalorder %s52, %s54
      %p58 = scmp.eq.s32.totalorder %s18, 0
      %p59 = por %p57, %p58
      %p60 = scmp.ne.s32.totalorder %s52, %s54
      %p61 = scmp.eq.s32.totalorder %s23, 1
      %p62 = por %p60, %p61
      %p63 = scmp.ne.s32.totalorder %s54, %s55
      %p64 = scmp.eq.s32.totalorder %s23, 0
      %p65 = por %p63, %p64
      %p66 = scmp.ne.s32.totalorder %s54, %s55
      %p67 = scmp.eq.s32.totalorder %s24, 1
      %p68 = por %p66, %p67
      %p70 = scmp.ne.s32.totalorder %s55, %s69
      %p71 = scmp.eq.s32.totalorder %s24, 0
      %p72 = por %p70, %p71
      %s74 = sadd.s32 %s73, 1
      %p77 = scmp.eq.s32.totalorder %s18, 1
      %p78 = scmp.ne.s32.totalorder %s73, %s75
      %p79 = scmp.eq.s32.totalorder %s18, 0
      %p80 = por %p78, %p79
      %p81 = scmp.ne.s32.totalorder %s73, %s75
      %p82 = scmp.eq.s32.totalorder %s23, 1
      %p83 = por %p81, %p82
      %p84 = scmp.ne.s32.totalorder %s75, %s76
      %p85 = scmp.eq.s32.totalorder %s23, 0
      %p86 = por %p84, %p85
      %p87 = scmp.ne.s32.totalorder %s75, %s76
      %p88 = scmp.eq.s32.totalorder %s24, 1
      %p89 = por %p87, %p88
      %p91 = scmp.ne.s32.totalorder %s76, %s90
      %p92 = scmp.eq.s32.totalorder %s24, 0
      %p93 = por %p91, %p92
      %s95 = sadd.s32 %s94, 1
      %p98 = scmp.eq.s32.totalorder %s18, 1
      %p99 = scmp.ne.s32.totalorder %s94, %s96
      %p100 = scmp.eq.s32.totalorder %s18, 0
      %p101 = por %p99, %p100
      %p102 = scmp.ne.s32.totalorder %s94, %s96
      %p103 = scmp.eq.s32.totalorder %s23, 1
      %p104 = por %p102, %p103
      %p105 = scmp.ne.s32.totalorder %s96, %s97
      %p106 = scmp.eq.s32.totalorder %s23, 0
      %p107 = por %p105, %p106
      %p108 = scmp.ne.s32.totalorder %s96, %s97
      %p109 = scmp.eq.s32.totalorder %s24, 1
      %p110 = por %p108, %p109
      %p112 = scmp.ne.s32.totalorder %s97, %s111
      %p113 = scmp.eq.s32.totalorder %s24, 0
      %p114 = por %p112, %p113
      %s116 = sadd.s32 %s115, 1
      %p119 = scmp.eq.s32.totalorder %s18, 1
      %p120 = scmp.ne.s32.totalorder %s115, %s117
      %p121 = scmp.eq.s32.totalorder %s18, 0
      %p122 = por %p120, %p121
      %p123 = scmp.ne.s32.totalorder %s115, %s117
      %p124 = scmp.eq.s32.totalorder %s23, 1
      %p125 = por %p123, %p124
      %p126 = scmp.ne.s32.totalorder %s117, %s118
      %p127 = scmp.eq.s32.totalorder %s23, 0
      %p128 = por %p126, %p127
      %p129 = scmp.ne.s32.totalorder %s117, %s118
      %p130 = scmp.eq.s32.totalorder %s24, 1
      %p131 = por %p129, %p130
      %p133 = scmp.ne.s32.totalorder %s118, %s132
      %p134 = scmp.eq.s32.totalorder %s24, 0
      %p135 = por %p133, %p134
      %s136 = ssub.s32 %s18, %s25
      %p137 = scmp.eq.s32.totalorder %s136, 0
      %s139 = sadd.s32 %s138, 1
      %s140 = scalar_select %p137, %s138, %s139
      %p143 = pneg %p137
      %p144 = scmp.eq.s32.totalorder %s18, 1
      %p145 = por %p143, %p144
      %p146 = scmp.ne.s32.totalorder %s138, %s141
      %p147 = scmp.eq.s32.totalorder %s18, 0
      %p148 = por %p146, %p147
      %p149 = scmp.ne.s32.totalorder %s138, %s141
      %p150 = scmp.eq.s32.totalorder %s23, 1
      %p151 = por %p149, %p150
      %p152 = scmp.ne.s32.totalorder %s141, %s142
      %p153 = scmp.eq.s32.totalorder %s23, 0
      %p154 = por %p152, %p153
      %p155 = scmp.ne.s32.totalorder %s141, %s142
      %p156 = scmp.eq.s32.totalorder %s24, 1
      %p157 = por %p155, %p156
      %p159 = scmp.ne.s32.totalorder %s142, %s158
      %p160 = scmp.eq.s32.totalorder %s24, 0
      %p161 = por %p159, %p160
      %p162 = scmp.le.s32.totalorder 1, %s18
      %p163 = scmp.lt.s32.totalorder %s18, 3
      %p164 = pnand %p162, %p163
      %p165 = pneg %p164
      // Predicated region
      $region9: #{tpu_custom_call.1} parent=5 // pred_check
        _
      $region10: #{tpu_custom_call.1} parent=5 // pred_check_branch
        %167 = sbr.rel (%p164) target = $region12
      $region11: #{tpu_custom_call.1} parent=5 // pred_region
        %s168 = ssub.s32 %s18, 1
        // Predicated region
        $region13: #{tpu_custom_call.1} parent=11 // pred_check
          %p169 = pneg %p65
        $region14: #{tpu_custom_call.1} parent=11 // pred_check_branch
          %171 = sbr.rel (%p169) target = $region16
        $region15: #{tpu_custom_call.1} parent=11 // pred_region
          _
        $region16: #{tpu_custom_call.1} parent=11 // pred_fallthru
          _
        // Predicated region
        $region17: #{tpu_custom_call.1} parent=11 // pred_check
          %p172 = pneg %p86
        $region18: #{tpu_custom_call.1} parent=11 // pred_check_branch
          %174 = sbr.rel (%p172) target = $region20
        $region19: #{tpu_custom_call.1} parent=11 // pred_region
          _
        $region20: #{tpu_custom_call.1} parent=11 // pred_fallthru
          _
        // Predicated region
        $region21: #{tpu_custom_call.1} parent=11 // pred_check
          %p175 = pneg %p107
        $region22: #{tpu_custom_call.1} parent=11 // pred_check_branch
          %177 = sbr.rel (%p175) target = $region24
        $region23: #{tpu_custom_call.1} parent=11 // pred_region
          %s179 = ssub.s32 8192, 8192
          %180 = vsyncadd [#allocation6], %s179
          %s181 = sshll.u32 [#allocation5], 4
          %s182 = int_to_ptr.vmem [resolvable:$true] %s181
          %187 = dma.hbm_to_vmem [thread:$0]  %s3, 8192, %s182, [#allocation6], 256, 256, 16
        $region24: #{tpu_custom_call.1} parent=11 // pred_fallthru
          _
        // Predicated region
        $region25: #{tpu_custom_call.1} parent=11 // pred_check
          %p188 = pneg %p128
        $region26: #{tpu_custom_call.1} parent=11 // pred_check_branch
          %190 = sbr.rel (%p188) target = $region28
        $region27: #{tpu_custom_call.1} parent=11 // pred_region
          %s192 = ssub.s32 8192, 8192
          %193 = vsyncadd [#allocation6], %s192
          %s194 = sshll.u32 [#allocation7], 4
          %s195 = int_to_ptr.vmem [resolvable:$true] %s194
          %200 = dma.hbm_to_vmem [thread:$0]  %s4, 8192, %s195, [#allocation6], 256, 256, 16
        $region28: #{tpu_custom_call.1} parent=11 // pred_fallthru
          _
      $region12: #{tpu_custom_call.1} parent=5 // pred_fallthru
        _
      %p201 = scmp.lt.s32.totalorder %s18, 2
      // Predicated region
      $region29: #{tpu_custom_call.1} parent=5 // pred_check
        %p202 = pneg %p201
      $region30: #{tpu_custom_call.1} parent=5 // pred_check_branch
        %204 = sbr.rel (%p202) target = $region32
      $region31: #{tpu_custom_call.1} parent=5 // pred_region
        // Predicated region
        $region33: #{tpu_custom_call.1} parent=31 // pred_check
          %p205 = pneg %p38
        $region34: #{tpu_custom_call.1} parent=31 // pred_check_branch
          %207 = sbr.rel (%p205) target = $region36
        $region35: #{tpu_custom_call.1} parent=31 // pred_region
          %s208 = sand.u32 %s28, 1
          %s209 = scalar_lea.sflag [#allocation3], %s208
          %s210 = sand.u32 %s28, 1
          %s211 = smul.addr %s210, 64
          %s212 = scalar_lea.vmem [#allocation2], %s211
          %s214 = ssub.s32 1024, 1024
          %215 = vsyncadd %s209, %s214
          %s216 = smul.addr %s18, 8
          %s217 = smul.addr %s216, 128
          %s218 = scalar_lea.hbm %s0, %s217
          %s219 = sshll.u32 %s212, 4
          %s220 = int_to_ptr.vmem [resolvable:$true] %s219
          %225 = dma.hbm_to_vmem [thread:$0]  %s218, 1024, %s220, %s209, 256, 256, 16
        $region36: #{tpu_custom_call.1} parent=31 // pred_fallthru
          _
      $region32: #{tpu_custom_call.1} parent=5 // pred_fallthru
        _
      %p226 = scmp.le.s32.totalorder 1, %s18
      %p227 = scmp.lt.s32.totalorder %s18, 3
      %p228 = pnand %p226, %p227
      %p229 = pneg %p228
      // Predicated region
      $region37: #{tpu_custom_call.1} parent=5 // pred_check
        _
      $region38: #{tpu_custom_call.1} parent=5 // pred_check_branch
        %231 = sbr.rel (%p228) target = $region40
      $region39: #{tpu_custom_call.1} parent=5 // pred_region
        %s232 = ssub.s32 %s18, 1
        %s233 = sand.u32 %s31, 1
        %s234 = scalar_lea.sflag [#allocation3], %s233
        %s235 = sand.u32 %s31, 1
        %s236 = smul.addr %s235, 64
        %s237 = scalar_lea.vmem [#allocation2], %s236
        // Predicated region
        $region41: #{tpu_custom_call.1} parent=39 // pred_check
          %p238 = pneg %p44
        $region42: #{tpu_custom_call.1} parent=39 // pred_check_branch
          %240 = sbr.rel (%p238) target = $region44
        $region43: #{tpu_custom_call.1} parent=39 // pred_region
          %241 = dma.done %s234, 1024
        $region44: #{tpu_custom_call.1} parent=39 // pred_fallthru
          _
        // Predicated region
        $region45: #{tpu_custom_call.1} parent=39 // pred_check
          %p242 = pneg %p107
        $region46: #{tpu_custom_call.1} parent=39 // pred_check_branch
          %244 = sbr.rel (%p242) target = $region48
        $region47: #{tpu_custom_call.1} parent=39 // pred_region
          %245 = dma.done [#allocation6], 8192
        $region48: #{tpu_custom_call.1} parent=39 // pred_fallthru
          _
        // Predicated region
        $region49: #{tpu_custom_call.1} parent=39 // pred_check
          %p246 = pneg %p128
        $region50: #{tpu_custom_call.1} parent=39 // pred_check_branch
          %248 = sbr.rel (%p246) target = $region52
        $region51: #{tpu_custom_call.1} parent=39 // pred_region
          %249 = dma.done [#allocation6], 8192
        $region52: #{tpu_custom_call.1} parent=39 // pred_fallthru
          _
        %s250 = sand.u32 %s31, 1
        %s251 = scalar_lea.sflag [#allocation3], %s250
        %s252 = sand.u32 %s31, 1
        %s253 = smul.addr %s252, 64
        %s254 = scalar_lea.vmem [#allocation2], %s253
        %p255 = pneg %p44
        %p256 = pneg %p41
        %p257 = pneg %p65
        %p258 = pneg %p62
        %p259 = pneg %p86
        %p260 = pneg %p83
        %p261 = pneg %p107
        %p262 = pneg %p104
        %p263 = pneg %p128
        %p264 = pneg %p125
        %p265 = pneg %p154
        %p266 = pneg %p151
        %s267 = sand.u32 %s141, 1
        %s268 = scalar_lea.sflag [#allocation4], %s267
        %s269 = sand.u32 %s141, 1
        %s270 = smul.addr %s269, 64
        %s271 = scalar_lea.vmem [#allocation8], %s270
        %v272 = vld [vmem:[%s237] sm:$0xff]
        %v273 = vld [vmem:[%s237 + $0x8] sm:$0xff]
        %v274 = vld [vmem:[%s237 + $0x10] sm:$0xff]
        %v275 = vld [vmem:[%s237 + $0x18] sm:$0xff]
        %v276 = vld [vmem:[%s237 + $0x20] sm:$0xff]
        %v277 = vld [vmem:[%s237 + $0x28] sm:$0xff]
        %v278 = vld [vmem:[%s237 + $0x30] sm:$0xff]
        %v279 = vld [vmem:[%s237 + $0x38] sm:$0xff]
        %v280 = vadd.f32 %v272, %v273
        %281 = vadd.xlane.f32.xlu0 %v280
        %v282 = vpop.xlane.xlu0 %281
        %v283 = vadd.f32 %v274, %v275
        %284 = vadd.xlane.f32.xlu0 %v283
        %v285 = vpop.xlane.xlu0 %284
        %v286 = vadd.f32 %v276, %v277
        %287 = vadd.xlane.f32.xlu0 %v286
        %v288 = vpop.xlane.xlu0 %287
        %v289 = vadd.f32 %v278, %v279
        %290 = vadd.xlane.f32.xlu0 %v289
        %v291 = vpop.xlane.xlu0 %290
        %v292 = vmul.f32 %v282, 0.00390625
        %v293 = vmul.f32 %v285, 0.00390625
        %v294 = vmul.f32 %v288, 0.00390625
        %v295 = vmul.f32 %v291, 0.00390625
        %v296 = vmax.f32 %v272, %v273
        %297 = vmax.xlane.f32.xlu0 %v296
        %v298 = vpop.xlane.xlu0 %297
        %v299 = vmax.f32 %v274, %v275
        %300 = vmax.xlane.f32.xlu0 %v299
        %v301 = vpop.xlane.xlu0 %300
        %v302 = vmax.f32 %v276, %v277
        %303 = vmax.xlane.f32.xlu0 %v302
        %v304 = vpop.xlane.xlu0 %303
        %v305 = vmax.f32 %v278, %v279
        %306 = vmax.xlane.f32.xlu0 %v305
        %v307 = vpop.xlane.xlu0 %306
        %v308 = vld [vmem:[%s1] sm:$0x3]
        %v309 = vld [vmem:[%s2] sm:$0xff]
        %v310 = vld [vmem:[%s2 + $0x8] sm:$0xff]
        %v311 = vld [vmem:[%s2 + $0x10] sm:$0xff]
        %v312 = vld [vmem:[%s2 + $0x18] sm:$0xff]
        %vm313 = vcmask 261120
        %v315 = vsel %vm313, %v308, 0
        %317 = vmatprep.subr.mxu0 0.0
        %318 = vmatpush1.msra.mxu0 %v292
        %319 = vmatprep.subr.mxu0 0.0
        %320 = vmatpush1.msra.mxu0 %v293
        %321 = vmatprep.subr.mxu0 0.0
        %322 = vmatpush1.msra.mxu0 %v294
        %323 = vmatprep.subr.mxu0 0.0
        %324 = vmatpush1.msra.mxu0 %v295
        %325 = vmatprep.subr.mxu0 0.0
        %326 = vmatpush1.msra.mxu0 0.0
        %327 = vmatprep.subr.mxu0 0.0
        %328 = vmatpush1.msra.mxu0 0.0
        %329 = vmatprep.subr.mxu0 0.0
        %330 = vmatpush1.msra.mxu0 0.0
        %331 = vmatprep.subr.mxu0 0.0
        %332 = vmatpush1.msra.mxu0 0.0
        %333 = vmatprep.subr.mxu0 0.0
        %334 = vmatpush1.msra.mxu0 0.0
        %335 = vmatprep.subr.mxu0 0.0
        %336 = vmatpush1.msra.mxu0 0.0
        %337 = vmatprep.subr.mxu0 0.0
        %338 = vmatpush1.msra.mxu0 0.0
        %339 = vmatprep.subr.mxu0 0.0
        %340 = vmatpush1.msra.mxu0 0.0
        %341 = vmatprep.subr.mxu0 0.0
        %342 = vmatpush1.msra.mxu0 0.0
        %343 = vmatprep.subr.mxu0 0.0
        %344 = vmatpush1.msra.mxu0 0.0
        %345 = vmatprep.subr.mxu0 0.0
        %346 = vmatpush1.msra.mxu0 0.0
        %347 = vmatprep.subr.mxu0 0.0
        %348 = vmatpush1.msra.mxu0 0.0
        %349 = vmatprep.subr.mxu0 0.0
        %350 = vmatpush1.msra.mxu0 0.0
        %351 = vmatprep.subr.mxu0 0.0
        %352 = vmatpush1.msra.mxu0 0.0
        %353 = vmatprep.subr.mxu0 0.0
        %354 = vmatpush1.msra.mxu0 0.0
        %355 = vmatprep.subr.mxu0 0.0
        %356 = vmatpush1.msra.mxu0 0.0
        %357 = vmatprep.subr.mxu0 0.0
        %358 = vmatpush1.msra.mxu0 0.0
        %359 = vmatprep.subr.mxu0 0.0
        %360 = vmatpush1.msra.mxu0 0.0
        %361 = vmatprep.subr.mxu0 0.0
        %362 = vmatpush1.msra.mxu0 0.0
        %363 = vmatprep.subr.mxu0 0.0
        %364 = vmatpush1.msra.mxu0 0.0
        %365 = vmatprep.subr.mxu0 0.0
        %366 = vmatpush1.msra.mxu0 0.0
        %367 = vmatprep.subr.mxu0 0.0
        %368 = vmatpush1.msra.mxu0 0.0
        %369 = vmatprep.subr.mxu0 0.0
        %370 = vmatpush1.msra.mxu0 0.0
        %371 = vmatprep.subr.mxu0 0.0
        %372 = vmatpush1.msra.mxu0 0.0
        %373 = vmatprep.subr.mxu0 0.0
        %374 = vmatpush1.msra.mxu0 0.0
        %375 = vmatprep.subr.mxu0 0.0
        %376 = vmatpush1.msra.mxu0 0.0
        %377 = vmatprep.subr.mxu0 0.0
        %378 = vmatpush1.msra.mxu0 0.0
        %379 = vmatprep.subr.mxu0 0.0
        %380 = vmatpush1.msra.mxu0 0.0
        %381 = vmatprep.mubr.f32.mxu0 0.0
        %382 = vmatmul.mubr.f32.gmra.mrb[0].mxu0 %v315
        %v383 = vpop.f32.mrb[0].mxu0
        %v384 = vadd.f32 0.0, %v383
        %v385 = vpop.f32.mrb[0].mxu0
        %386 = vdwg.mxu0
        %v387 = vmax.f32 %v384, 0.0
        %388 = vmatprep.subr.mxu0 0.0
        %389 = vmatpush1.msra.mxu0 %v298
        %390 = vmatprep.subr.mxu0 0.0
        %391 = vmatpush1.msra.mxu0 %v301
        %392 = vmatprep.subr.mxu0 0.0
        %393 = vmatpush1.msra.mxu0 %v304
        %394 = vmatprep.subr.mxu0 0.0
        %395 = vmatpush1.msra.mxu0 %v307
        %396 = vmatprep.subr.mxu0 0.0
        %397 = vmatpush1.msra.mxu0 0.0
        %398 = vmatprep.subr.mxu0 0.0
        %399 = vmatpush1.msra.mxu0 0.0
        %400 = vmatprep.subr.mxu0 0.0
        %401 = vmatpush1.msra.mxu0 0.0
        %402 = vmatprep.subr.mxu0 0.0
        %403 = vmatpush1.msra.mxu0 0.0
        %404 = vmatprep.subr.mxu0 0.0
        %405 = vmatpush1.msra.mxu0 0.0
        %406 = vmatprep.subr.mxu0 0.0
        %407 = vmatpush1.msra.mxu0 0.0
        %408 = vmatprep.subr.mxu0 0.0
        %409 = vmatpush1.msra.mxu0 0.0
        %410 = vmatprep.subr.mxu0 0.0
        %411 = vmatpush1.msra.mxu0 0.0
        %412 = vmatprep.subr.mxu0 0.0
        %413 = vmatpush1.msra.mxu0 0.0
        %414 = vmatprep.subr.mxu0 0.0
        %415 = vmatpush1.msra.mxu0 0.0
        %416 = vmatprep.subr.mxu0 0.0
        %417 = vmatpush1.msra.mxu0 0.0
        %418 = vmatprep.subr.mxu0 0.0
        %419 = vmatpush1.msra.mxu0 0.0
        %420 = vmatprep.subr.mxu0 0.0
        %421 = vmatpush1.msra.mxu0 0.0
        %422 = vmatprep.subr.mxu0 0.0
        %423 = vmatpush1.msra.mxu0 0.0
        %424 = vmatprep.subr.mxu0 0.0
        %425 = vmatpush1.msra.mxu0 0.0
        %426 = vmatprep.subr.mxu0 0.0
        %427 = vmatpush1.msra.mxu0 0.0
        %428 = vmatprep.subr.mxu0 0.0
        %429 = vmatpush1.msra.mxu0 0.0
        %430 = vmatprep.subr.mxu0 0.0
        %431 = vmatpush1.msra.mxu0 0.0
        %432 = vmatprep.subr.mxu0 0.0
        %433 = vmatpush1.msra.mxu0 0.0
        %434 = vmatprep.subr.mxu0 0.0
        %435 = vmatpush1.msra.mxu0 0.0
        %436 = vmatprep.subr.mxu0 0.0
        %437 = vmatpush1.msra.mxu0 0.0
        %438 = vmatprep.subr.mxu0 0.0
        %439 = vmatpush1.msra.mxu0 0.0
        %440 = vmatprep.subr.mxu0 0.0
        %441 = vmatpush1.msra.mxu0 0.0
        %442 = vmatprep.subr.mxu0 0.0
        %443 = vmatpush1.msra.mxu0 0.0
        %444 = vmatprep.subr.mxu0 0.0
        %445 = vmatpush1.msra.mxu0 0.0
        %446 = vmatprep.subr.mxu0 0.0
        %447 = vmatpush1.msra.mxu0 0.0
        %448 = vmatprep.subr.mxu0 0.0
        %449 = vmatpush1.msra.mxu0 0.0
        %450 = vmatprep.subr.mxu0 0.0
        %451 = vmatpush1.msra.mxu0 0.0
        %452 = vmatprep.mubr.f32.mxu0 0.0
        %453 = vmatmul.mubr.f32.gmra.mrb[0].mxu0 %v315
        %v454 = vpop.f32.mrb[0].mxu0
        %v455 = vadd.f32 0.0, %v454
        %v456 = vpop.f32.mrb[0].mxu0
        %457 = vdwg.mxu0
        %v458 = vmax.f32 %v455, 0.0
        %vm459 = vcmask 15360
        %v461 = vsel %vm459, %v309, 0
        %v464 = vsel %vm459, %v310, 0
        %v467 = vsel %vm459, %v311, 0
        %v470 = vsel %vm459, %v312, 0
        %vm472 = vcmask 1041408
        %v474 = vsel %vm472, %v458, 0
        %476 = vmatprep.subr.mxu0 0.0
        %477 = vmatpush1.msra.mxu0 %v474
        %478 = vmatprep.subr.mxu0 0.0
        %479 = vmatpush1.msra.mxu0 0.0
        %480 = vmatprep.subr.mxu0 0.0
        %481 = vmatpush1.msra.mxu0 0.0
        %482 = vmatprep.subr.mxu0 0.0
        %483 = vmatpush1.msra.mxu0 0.0
        %484 = vmatprep.subr.mxu0 0.0
        %485 = vmatpush1.msra.mxu0 0.0
        %486 = vmatprep.subr.mxu0 0.0
        %487 = vmatpush1.msra.mxu0 0.0
        %488 = vmatprep.subr.mxu0 0.0
        %489 = vmatpush1.msra.mxu0 0.0
        %490 = vmatprep.subr.mxu0 0.0
        %491 = vmatpush1.msra.mxu0 0.0
        %492 = vmatprep.subr.mxu0 0.0
        %493 = vmatpush1.msra.mxu0 0.0
        %494 = vmatprep.subr.mxu0 0.0
        %495 = vmatpush1.msra.mxu0 0.0
        %496 = vmatprep.subr.mxu0 0.0
        %497 = vmatpush1.msra.mxu0 0.0
        %498 = vmatprep.subr.mxu0 0.0
        %499 = vmatpush1.msra.mxu0 0.0
        %500 = vmatprep.subr.mxu0 0.0
        %501 = vmatpush1.msra.mxu0 0.0
        %502 = vmatprep.subr.mxu0 0.0
        %503 = vmatpush1.msra.mxu0 0.0
        %504 = vmatprep.subr.mxu0 0.0
        %505 = vmatpush1.msra.mxu0 0.0
        %506 = vmatprep.subr.mxu0 0.0
        %507 = vmatpush1.msra.mxu0 0.0
        %508 = vmatprep.subr.mxu0 0.0
        %509 = vmatpush1.msra.mxu0 0.0
        %510 = vmatprep.subr.mxu0 0.0
        %511 = vmatpush1.msra.mxu0 0.0
        %512 = vmatprep.subr.mxu0 0.0
        %513 = vmatpush1.msra.mxu0 0.0
        %514 = vmatprep.subr.mxu0 0.0
        %515 = vmatpush1.msra.mxu0 0.0
        %516 = vmatprep.subr.mxu0 0.0
        %517 = vmatpush1.msra.mxu0 0.0
        %518 = vmatprep.subr.mxu0 0.0
        %519 = vmatpush1.msra.mxu0 0.0
        %520 = vmatprep.subr.mxu0 0.0
        %521 = vmatpush1.msra.mxu0 0.0
        %522 = vmatprep.subr.mxu0 0.0
        %523 = vmatpush1.msra.mxu0 0.0
        %524 = vmatprep.subr.mxu0 0.0
        %525 = vmatpush1.msra.mxu0 0.0
        %526 = vmatprep.subr.mxu0 0.0
        %527 = vmatpush1.msra.mxu0 0.0
        %528 = vmatprep.subr.mxu0 0.0
        %529 = vmatpush1.msra.mxu0 0.0
        %530 = vmatprep.subr.mxu0 0.0
        %531 = vmatpush1.msra.mxu0 0.0
        %532 = vmatprep.subr.mxu0 0.0
        %533 = vmatpush1.msra.mxu0 0.0
        %534 = vmatprep.subr.mxu0 0.0
        %535 = vmatpush1.msra.mxu0 0.0
        %536 = vmatprep.subr.mxu0 0.0
        %537 = vmatpush1.msra.mxu0 0.0
        %538 = vmatprep.subr.mxu0 0.0
        %539 = vmatpush1.msra.mxu0 0.0
        %540 = vmatprep.mubr.f32.mxu0 0.0
        %541 = vmatmul.mubr.f32.gmra.mrb[0].mxu0 %v461
        %v542 = vpop.f32.mrb[0].mxu0
        %v543 = vadd.f32 0.0, %v542
        %v544 = vpop.f32.mrb[0].mxu0
        %545 = vmatprep.mubr.f32.mxu0 0.0
        %546 = vmatmul.mubr.f32.gmra.mrb[0].mxu0 %v464
        %v547 = vpop.f32.mrb[0].mxu0
        %v548 = vadd.f32 0.0, %v547
        %v549 = vpop.f32.mrb[0].mxu0
        %550 = vmatprep.mubr.f32.mxu0 0.0
        %551 = vmatmul.mubr.f32.gmra.mrb[0].mxu0 %v467
        %v552 = vpop.f32.mrb[0].mxu0
        %v553 = vadd.f32 0.0, %v552
        %v554 = vpop.f32.mrb[0].mxu0
        %555 = vmatprep.mubr.f32.mxu0 0.0
        %556 = vmatmul.mubr.f32.gmra.mrb[0].mxu0 %v470
        %v557 = vpop.f32.mrb[0].mxu0
        %v558 = vadd.f32 0.0, %v557
        %v559 = vpop.f32.mrb[0].mxu0
        %560 = vdwg.mxu0
        %v562 = vsel %vm472, %v387, 0
        %564 = vmatprep.subr.mxu0 0.0
        %565 = vmatpush1.msra.mxu0 %v562
        %566 = vmatprep.subr.mxu0 0.0
        %567 = vmatpush1.msra.mxu0 0.0
        %568 = vmatprep.subr.mxu0 0.0
        %569 = vmatpush1.msra.mxu0 0.0
        %570 = vmatprep.subr.mxu0 0.0
        %571 = vmatpush1.msra.mxu0 0.0
        %572 = vmatprep.subr.mxu0 0.0
        %573 = vmatpush1.msra.mxu0 0.0
        %574 = vmatprep.subr.mxu0 0.0
        %575 = vmatpush1.msra.mxu0 0.0
        %576 = vmatprep.subr.mxu0 0.0
        %577 = vmatpush1.msra.mxu0 0.0
        %578 = vmatprep.subr.mxu0 0.0
        %579 = vmatpush1.msra.mxu0 0.0
        %580 = vmatprep.subr.mxu0 0.0
        %581 = vmatpush1.msra.mxu0 0.0
        %582 = vmatprep.subr.mxu0 0.0
        %583 = vmatpush1.msra.mxu0 0.0
        %584 = vmatprep.subr.mxu0 0.0
        %585 = vmatpush1.msra.mxu0 0.0
        %586 = vmatprep.subr.mxu0 0.0
        %587 = vmatpush1.msra.mxu0 0.0
        %588 = vmatprep.subr.mxu0 0.0
        %589 = vmatpush1.msra.mxu0 0.0
        %590 = vmatprep.subr.mxu0 0.0
        %591 = vmatpush1.msra.mxu0 0.0
        %592 = vmatprep.subr.mxu0 0.0
        %593 = vmatpush1.msra.mxu0 0.0
        %594 = vmatprep.subr.mxu0 0.0
        %595 = vmatpush1.msra.mxu0 0.0
        %596 = vmatprep.subr.mxu0 0.0
        %597 = vmatpush1.msra.mxu0 0.0
        %598 = vmatprep.subr.mxu0 0.0
        %599 = vmatpush1.msra.mxu0 0.0
        %600 = vmatprep.subr.mxu0 0.0
        %601 = vmatpush1.msra.mxu0 0.0
        %602 = vmatprep.subr.mxu0 0.0
        %603 = vmatpush1.msra.mxu0 0.0
        %604 = vmatprep.subr.mxu0 0.0
        %605 = vmatpush1.msra.mxu0 0.0
        %606 = vmatprep.subr.mxu0 0.0
        %607 = vmatpush1.msra.mxu0 0.0
        %608 = vmatprep.subr.mxu0 0.0
        %609 = vmatpush1.msra.mxu0 0.0
        %610 = vmatprep.subr.mxu0 0.0
        %611 = vmatpush1.msra.mxu0 0.0
        %612 = vmatprep.subr.mxu0 0.0
        %613 = vmatpush1.msra.mxu0 0.0
        %614 = vmatprep.subr.mxu0 0.0
        %615 = vmatpush1.msra.mxu0 0.0
        %616 = vmatprep.subr.mxu0 0.0
        %617 = vmatpush1.msra.mxu0 0.0
        %618 = vmatprep.subr.mxu0 0.0
        %619 = vmatpush1.msra.mxu0 0.0
        %620 = vmatprep.subr.mxu0 0.0
        %621 = vmatpush1.msra.mxu0 0.0
        %622 = vmatprep.subr.mxu0 0.0
        %623 = vmatpush1.msra.mxu0 0.0
        %624 = vmatprep.subr.mxu0 0.0
        %625 = vmatpush1.msra.mxu0 0.0
        %626 = vmatprep.subr.mxu0 0.0
        %627 = vmatpush1.msra.mxu0 0.0
        %628 = vmatprep.mubr.f32.mxu0 0.0
        %629 = vmatmul.mubr.f32.gmra.mrb[0].mxu0 %v461
        %v630 = vpop.f32.mrb[0].mxu0
        %v631 = vadd.f32 %v543, %v630
        %v632 = vpop.f32.mrb[0].mxu0
        %633 = vmatprep.mubr.f32.mxu0 0.0
        %634 = vmatmul.mubr.f32.gmra.mrb[0].mxu0 %v464
        %v635 = vpop.f32.mrb[0].mxu0
        %v636 = vadd.f32 %v548, %v635
        %v637 = vpop.f32.mrb[0].mxu0
        %638 = vmatprep.mubr.f32.mxu0 0.0
        %639 = vmatmul.mubr.f32.gmra.mrb[0].mxu0 %v467
        %v640 = vpop.f32.mrb[0].mxu0
        %v641 = vadd.f32 %v553, %v640
        %v642 = vpop.f32.mrb[0].mxu0
        %643 = vmatprep.mubr.f32.mxu0 0.0
        %644 = vmatmul.mubr.f32.gmra.mrb[0].mxu0 %v470
        %v645 = vpop.f32.mrb[0].mxu0
        %v646 = vadd.f32 %v558, %v645
        %v647 = vpop.f32.mrb[0].mxu0
        %648 = vdwg.mxu0
        %v649 = vsub.f32 0.0, %v631
        %v650 = vsub.f32 0.0, %v636
        %v651 = vsub.f32 0.0, %v641
        %v652 = vsub.f32 0.0, %v646
        %v653 = vmul.f32 %v649, 1.442695
        %v654 = vpow.pop %v653
        %v655 = vmul.f32 %v650, 1.442695
        %v656 = vpow.pop %v655
        %v657 = vmul.f32 %v651, 1.442695
        %v658 = vpow.pop %v657
        %v659 = vmul.f32 %v652, 1.442695
        %v660 = vpow.pop %v659
        %v661 = vadd.f32 %v654, 1.0
        %v662 = vadd.f32 %v656, 1.0
        %v663 = vadd.f32 %v658, 1.0
        %v664 = vadd.f32 %v660, 1.0
        %v665 = vrcp.pop %v661
        %v666 = vmul.f32 1.0, %v665
        %v667 = vrcp.pop %v662
        %v668 = vmul.f32 1.0, %v667
        %v669 = vrcp.pop %v663
        %v670 = vmul.f32 1.0, %v669
        %v671 = vrcp.pop %v664
        %v672 = vmul.f32 1.0, %v671
        %674 = vset.pattern.permute.xlu0 0
        %675 = vperm.xlu0 %674, %v666
        %v676 = vpop.permute.xlu0 %675
        %679 = vset.pattern.permute.xlu0 0
        %680 = vperm.xlu0 %679, %v668
        %v681 = vpop.permute.xlu0 %680
        %684 = vset.pattern.permute.xlu0 0
        %685 = vperm.xlu0 %684, %v670
        %v686 = vpop.permute.xlu0 %685
        %689 = vset.pattern.permute.xlu0 0
        %690 = vperm.xlu0 %689, %v672
        %v691 = vpop.permute.xlu0 %690
        %v693 = vmul.f32 %v272, %v676
        %v694 = vmul.f32 %v273, %v676
        %v695 = vmul.f32 %v274, %v681
        %v696 = vmul.f32 %v275, %v681
        %v697 = vmul.f32 %v276, %v686
        %v698 = vmul.f32 %v277, %v686
        %v699 = vmul.f32 %v278, %v691
        %v700 = vmul.f32 %v279, %v691
        %v701 = vadd.f32 %v693, %v695
        %v702 = vadd.f32 %v701, %v697
        %v703 = vadd.f32 %v702, %v699
        %v704 = vrot.slane %v703, 4
        %v705 = vadd.f32 %v703, %v704
        %v706 = vrot.slane %v705, 2
        %v707 = vadd.f32 %v705, %v706
        %v708 = vrot.slane %v707, 1
        %v709 = vadd.f32 %v707, %v708
        %v710 = vadd.f32 %v694, %v696
        %v711 = vadd.f32 %v710, %v698
        %v712 = vadd.f32 %v711, %v700
        %v713 = vrot.slane %v712, 4
        %v714 = vadd.f32 %v712, %v713
        %v715 = vrot.slane %v714, 2
        %v716 = vadd.f32 %v714, %v715
        %v717 = vrot.slane %v716, 1
        %v718 = vadd.f32 %v716, %v717
        %v719 = vmul.f32 %v709, 0.03125
        %v720 = vmul.f32 %v718, 0.03125
        %v721 = vmax.f32 %v693, %v697
        %v722 = vmax.f32 %v695, %v699
        %v723 = vmax.f32 %v721, %v722
        %v724 = vrot.slane %v723, 4
        %v725 = vmax.f32 %v723, %v724
        %v726 = vrot.slane %v725, 2
        %v727 = vmax.f32 %v725, %v726
        %v728 = vrot.slane %v727, 1
        %v729 = vmax.f32 %v727, %v728
        %v730 = vmax.f32 %v694, %v698
        %v731 = vmax.f32 %v696, %v700
        %v732 = vmax.f32 %v730, %v731
        %v733 = vrot.slane %v732, 4
        %v734 = vmax.f32 %v732, %v733
        %v735 = vrot.slane %v734, 2
        %v736 = vmax.f32 %v734, %v735
        %v737 = vrot.slane %v736, 1
        %v738 = vmax.f32 %v736, %v737
        %v739 = vld [vmem:[#allocation5] sm:$0xff]
        %v740 = vld [vmem:[#allocation5 + $0x8] sm:$0xff]
        %v741 = vld [vmem:[#allocation5 + $0x10] sm:$0xff]
        %v742 = vld [vmem:[#allocation5 + $0x18] sm:$0xff]
        %v743 = vld [vmem:[#allocation5 + $0x20] sm:$0xff]
        %v744 = vld [vmem:[#allocation5 + $0x28] sm:$0xff]
        %v745 = vld [vmem:[#allocation5 + $0x30] sm:$0xff]
        %v746 = vld [vmem:[#allocation5 + $0x38] sm:$0xff]
        %v747 = vld [vmem:[#allocation5 + $0x40] sm:$0xff]
        %v748 = vld [vmem:[#allocation5 + $0x48] sm:$0xff]
        %v749 = vld [vmem:[#allocation5 + $0x50] sm:$0xff]
        %v750 = vld [vmem:[#allocation5 + $0x58] sm:$0xff]
        %v751 = vld [vmem:[#allocation5 + $0x60] sm:$0xff]
        %v752 = vld [vmem:[#allocation5 + $0x68] sm:$0xff]
        %v753 = vld [vmem:[#allocation5 + $0x70] sm:$0xff]
        %v754 = vld [vmem:[#allocation5 + $0x78] sm:$0xff]
        %v755 = vld [vmem:[#allocation5 + $0x80] sm:$0xff]
        %v756 = vld [vmem:[#allocation5 + $0x88] sm:$0xff]
        %v757 = vld [vmem:[#allocation5 + $0x90] sm:$0xff]
        %v758 = vld [vmem:[#allocation5 + $0x98] sm:$0xff]
        %v759 = vld [vmem:[#allocation5 + $0xa0] sm:$0xff]
        %v760 = vld [vmem:[#allocation5 + $0xa8] sm:$0xff]
        %v761 = vld [vmem:[#allocation5 + $0xb0] sm:$0xff]
        %v762 = vld [vmem:[#allocation5 + $0xb8] sm:$0xff]
        %v763 = vld [vmem:[#allocation5 + $0xc0] sm:$0xff]
        %v764 = vld [vmem:[#allocation5 + $0xc8] sm:$0xff]
        %v765 = vld [vmem:[#allocation5 + $0xd0] sm:$0xff]
        %v766 = vld [vmem:[#allocation5 + $0xd8] sm:$0xff]
        %v767 = vld [vmem:[#allocation5 + $0xe0] sm:$0xff]
        %v768 = vld [vmem:[#allocation5 + $0xe8] sm:$0xff]
        %v769 = vld [vmem:[#allocation5 + $0xf0] sm:$0xff]
        %v770 = vld [vmem:[#allocation5 + $0xf8] sm:$0xff]
        %v771 = vld [vmem:[#allocation5 + $0x100] sm:$0xff]
        %v772 = vld [vmem:[#allocation5 + $0x108] sm:$0xff]
        %v773 = vld [vmem:[#allocation5 + $0x110] sm:$0xff]
        %v774 = vld [vmem:[#allocation5 + $0x118] sm:$0xff]
        %v775 = vld [vmem:[#allocation5 + $0x120] sm:$0xff]
        %v776 = vld [vmem:[#allocation5 + $0x128] sm:$0xff]
        %v777 = vld [vmem:[#allocation5 + $0x130] sm:$0xff]
        %v778 = vld [vmem:[#allocation5 + $0x138] sm:$0xff]
        %v779 = vld [vmem:[#allocation5 + $0x140] sm:$0xff]
        %v780 = vld [vmem:[#allocation5 + $0x148] sm:$0xff]
        %v781 = vld [vmem:[#allocation5 + $0x150] sm:$0xff]
        %v782 = vld [vmem:[#allocation5 + $0x158] sm:$0xff]
        %v783 = vld [vmem:[#allocation5 + $0x160] sm:$0xff]
        %v784 = vld [vmem:[#allocation5 + $0x168] sm:$0xff]
        %v785 = vld [vmem:[#allocation5 + $0x170] sm:$0xff]
        %v786 = vld [vmem:[#allocation5 + $0x178] sm:$0xff]
        %v787 = vld [vmem:[#allocation5 + $0x180] sm:$0xff]
        %v788 = vld [vmem:[#allocation5 + $0x188] sm:$0xff]
        %v789 = vld [vmem:[#allocation5 + $0x190] sm:$0xff]
        %v790 = vld [vmem:[#allocation5 + $0x198] sm:$0xff]
        %v791 = vld [vmem:[#allocation5 + $0x1a0] sm:$0xff]
        %v792 = vld [vmem:[#allocation5 + $0x1a8] sm:$0xff]
        %v793 = vld [vmem:[#allocation5 + $0x1b0] sm:$0xff]
        %v794 = vld [vmem:[#allocation5 + $0x1b8] sm:$0xff]
        %v795 = vld [vmem:[#allocation5 + $0x1c0] sm:$0xff]
        %v796 = vld [vmem:[#allocation5 + $0x1c8] sm:$0xff]
        %v797 = vld [vmem:[#allocation5 + $0x1d0] sm:$0xff]
        %v798 = vld [vmem:[#allocation5 + $0x1d8] sm:$0xff]
        %v799 = vld [vmem:[#allocation5 + $0x1e0] sm:$0xff]
        %v800 = vld [vmem:[#allocation5 + $0x1e8] sm:$0xff]
        %v801 = vld [vmem:[#allocation5 + $0x1f0] sm:$0xff]
        %v802 = vld [vmem:[#allocation5 + $0x1f8] sm:$0xff]
        %v803 = vld [vmem:[#allocation7] sm:$0xff]
        %v804 = vld [vmem:[#allocation7 + $0x8] sm:$0xff]
        %v805 = vld [vmem:[#allocation7 + $0x10] sm:$0xff]
        %v806 = vld [vmem:[#allocation7 + $0x18] sm:$0xff]
        %v807 = vld [vmem:[#allocation7 + $0x20] sm:$0xff]
        %v808 = vld [vmem:[#allocation7 + $0x28] sm:$0xff]
        %v809 = vld [vmem:[#allocation7 + $0x30] sm:$0xff]
        %v810 = vld [vmem:[#allocation7 + $0x38] sm:$0xff]
        %v811 = vld [vmem:[#allocation7 + $0x40] sm:$0xff]
        %v812 = vld [vmem:[#allocation7 + $0x48] sm:$0xff]
        %v813 = vld [vmem:[#allocation7 + $0x50] sm:$0xff]
        %v814 = vld [vmem:[#allocation7 + $0x58] sm:$0xff]
        %v815 = vld [vmem:[#allocation7 + $0x60] sm:$0xff]
        %v816 = vld [vmem:[#allocation7 + $0x68] sm:$0xff]
        %v817 = vld [vmem:[#allocation7 + $0x70] sm:$0xff]
        %v818 = vld [vmem:[#allocation7 + $0x78] sm:$0xff]
        %v819 = vld [vmem:[#allocation7 + $0x80] sm:$0xff]
        %v820 = vld [vmem:[#allocation7 + $0x88] sm:$0xff]
        %v821 = vld [vmem:[#allocation7 + $0x90] sm:$0xff]
        %v822 = vld [vmem:[#allocation7 + $0x98] sm:$0xff]
        %v823 = vld [vmem:[#allocation7 + $0xa0] sm:$0xff]
        %v824 = vld [vmem:[#allocation7 + $0xa8] sm:$0xff]
        %v825 = vld [vmem:[#allocation7 + $0xb0] sm:$0xff]
        %v826 = vld [vmem:[#allocation7 + $0xb8] sm:$0xff]
        %v827 = vld [vmem:[#allocation7 + $0xc0] sm:$0xff]
        %v828 = vld [vmem:[#allocation7 + $0xc8] sm:$0xff]
        %v829 = vld [vmem:[#allocation7 + $0xd0] sm:$0xff]
        %v830 = vld [vmem:[#allocation7 + $0xd8] sm:$0xff]
        %v831 = vld [vmem:[#allocation7 + $0xe0] sm:$0xff]
        %v832 = vld [vmem:[#allocation7 + $0xe8] sm:$0xff]
        %v833 = vld [vmem:[#allocation7 + $0xf0] sm:$0xff]
        %v834 = vld [vmem:[#allocation7 + $0xf8] sm:$0xff]
        %v835 = vld [vmem:[#allocation7 + $0x100] sm:$0xff]
        %v836 = vld [vmem:[#allocation7 + $0x108] sm:$0xff]
        %v837 = vld [vmem:[#allocation7 + $0x110] sm:$0xff]
        %v838 = vld [vmem:[#allocation7 + $0x118] sm:$0xff]
        %v839 = vld [vmem:[#allocation7 + $0x120] sm:$0xff]
        %v840 = vld [vmem:[#allocation7 + $0x128] sm:$0xff]
        %v841 = vld [vmem:[#allocation7 + $0x130] sm:$0xff]
        %v842 = vld [vmem:[#allocation7 + $0x138] sm:$0xff]
        %v843 = vld [vmem:[#allocation7 + $0x140] sm:$0xff]
        %v844 = vld [vmem:[#allocation7 + $0x148] sm:$0xff]
        %v845 = vld [vmem:[#allocation7 + $0x150] sm:$0xff]
        %v846 = vld [vmem:[#allocation7 + $0x158] sm:$0xff]
        %v847 = vld [vmem:[#allocation7 + $0x160] sm:$0xff]
        %v848 = vld [vmem:[#allocation7 + $0x168] sm:$0xff]
        %v849 = vld [vmem:[#allocation7 + $0x170] sm:$0xff]
        %v850 = vld [vmem:[#allocation7 + $0x178] sm:$0xff]
        %v851 = vld [vmem:[#allocation7 + $0x180] sm:$0xff]
        %v852 = vld [vmem:[#allocation7 + $0x188] sm:$0xff]
        %v853 = vld [vmem:[#allocation7 + $0x190] sm:$0xff]
        %v854 = vld [vmem:[#allocation7 + $0x198] sm:$0xff]
        %v855 = vld [vmem:[#allocation7 + $0x1a0] sm:$0xff]
        %v856 = vld [vmem:[#allocation7 + $0x1a8] sm:$0xff]
        %v857 = vld [vmem:[#allocation7 + $0x1b0] sm:$0xff]
        %v858 = vld [vmem:[#allocation7 + $0x1b8] sm:$0xff]
        %v859 = vld [vmem:[#allocation7 + $0x1c0] sm:$0xff]
        %v860 = vld [vmem:[#allocation7 + $0x1c8] sm:$0xff]
        %v861 = vld [vmem:[#allocation7 + $0x1d0] sm:$0xff]
        %v862 = vld [vmem:[#allocation7 + $0x1d8] sm:$0xff]
        %v863 = vld [vmem:[#allocation7 + $0x1e0] sm:$0xff]
        %v864 = vld [vmem:[#allocation7 + $0x1e8] sm:$0xff]
        %v865 = vld [vmem:[#allocation7 + $0x1f0] sm:$0xff]
        %v866 = vld [vmem:[#allocation7 + $0x1f8] sm:$0xff]
        %867 = vmatprep.subr.mxu0 %v804
        %868 = vmatpush1.msra.mxu0 %v803
        %869 = vmatprep.subr.mxu0 %v806
        %870 = vmatpush1.msra.mxu0 %v805
        %871 = vmatprep.subr.mxu0 %v808
        %872 = vmatpush1.msra.mxu0 %v807
        %873 = vmatprep.subr.mxu0 %v810
        %874 = vmatpush1.msra.mxu0 %v809
        %875 = vmatprep.subr.mxu0 %v812
        %876 = vmatpush1.msra.mxu0 %v811
        %877 = vmatprep.subr.mxu0 %v814
        %878 = vmatpush1.msra.mxu0 %v813
        %879 = vmatprep.subr.mxu0 %v816
        %880 = vmatpush1.msra.mxu0 %v815
        %881 = vmatprep.subr.mxu0 %v818
        %882 = vmatpush1.msra.mxu0 %v817
        %883 = vmatprep.subr.mxu0 %v820
        %884 = vmatpush1.msra.mxu0 %v819
        %885 = vmatprep.subr.mxu0 %v822
        %886 = vmatpush1.msra.mxu0 %v821
        %887 = vmatprep.subr.mxu0 %v824
        %888 = vmatpush1.msra.mxu0 %v823
        %889 = vmatprep.subr.mxu0 %v826
        %890 = vmatpush1.msra.mxu0 %v825
        %891 = vmatprep.subr.mxu0 %v828
        %892 = vmatpush1.msra.mxu0 %v827
        %893 = vmatprep.subr.mxu0 %v830
        %894 = vmatpush1.msra.mxu0 %v829
        %895 = vmatprep.subr.mxu0 %v832
        %896 = vmatpush1.msra.mxu0 %v831
        %897 = vmatprep.subr.mxu0 %v834
        %898 = vmatpush1.msra.mxu0 %v833
        %899 = vmatprep.subr.mxu0 %v836
        %900 = vmatpush1.msra.mxu0 %v835
        %901 = vmatprep.subr.mxu0 %v838
        %902 = vmatpush1.msra.mxu0 %v837
        %903 = vmatprep.subr.mxu0 %v840
        %904 = vmatpush1.msra.mxu0 %v839
        %905 = vmatprep.subr.mxu0 %v842
        %906 = vmatpush1.msra.mxu0 %v841
        %907 = vmatprep.subr.mxu0 %v844
        %908 = vmatpush1.msra.mxu0 %v843
        %909 = vmatprep.subr.mxu0 %v846
        %910 = vmatpush1.msra.mxu0 %v845
        %911 = vmatprep.subr.mxu0 %v848
        %912 = vmatpush1.msra.mxu0 %v847
        %913 = vmatprep.subr.mxu0 %v850
        %914 = vmatpush1.msra.mxu0 %v849
        %915 = vmatprep.subr.mxu0 %v852
        %916 = vmatpush1.msra.mxu0 %v851
        %917 = vmatprep.subr.mxu0 %v854
        %918 = vmatpush1.msra.mxu0 %v853
        %919 = vmatprep.subr.mxu0 %v856
        %920 = vmatpush1.msra.mxu0 %v855
        %921 = vmatprep.subr.mxu0 %v858
        %922 = vmatpush1.msra.mxu0 %v857
        %923 = vmatprep.subr.mxu0 %v860
        %924 = vmatpush1.msra.mxu0 %v859
        %925 = vmatprep.subr.mxu0 %v862
        %926 = vmatpush1.msra.mxu0 %v861
        %927 = vmatprep.subr.mxu0 %v864
        %928 = vmatpush1.msra.mxu0 %v863
        %929 = vmatprep.subr.mxu0 %v866
        %930 = vmatpush1.msra.mxu0 %v865
        %931 = vmatprep.mubr.f32.mxu0 %v738
        %932 = vmatmul.mubr.f32.gmra.mrb[0].mxu0 %v729
        %v933 = vpop.f32.mrb[0].mxu0
        %v934 = vadd.f32 0.0, %v933
        %v935 = vpop.f32.mrb[0].mxu0
        %v936 = vadd.f32 0.0, %v935
        %937 = vdwg.mxu0
        %938 = vmatprep.subr.mxu0 %v740
        %939 = vmatpush1.msra.mxu0 %v739
        %940 = vmatprep.subr.mxu0 %v742
        %941 = vmatpush1.msra.mxu0 %v741
        %942 = vmatprep.subr.mxu0 %v744
        %943 = vmatpush1.msra.mxu0 %v743
        %944 = vmatprep.subr.mxu0 %v746
        %945 = vmatpush1.msra.mxu0 %v745
        %946 = vmatprep.subr.mxu0 %v748
        %947 = vmatpush1.msra.mxu0 %v747
        %948 = vmatprep.subr.mxu0 %v750
        %949 = vmatpush1.msra.mxu0 %v749
        %950 = vmatprep.subr.mxu0 %v752
        %951 = vmatpush1.msra.mxu0 %v751
        %952 = vmatprep.subr.mxu0 %v754
        %953 = vmatpush1.msra.mxu0 %v753
        %954 = vmatprep.subr.mxu0 %v756
        %955 = vmatpush1.msra.mxu0 %v755
        %956 = vmatprep.subr.mxu0 %v758
        %957 = vmatpush1.msra.mxu0 %v757
        %958 = vmatprep.subr.mxu0 %v760
        %959 = vmatpush1.msra.mxu0 %v759
        %960 = vmatprep.subr.mxu0 %v762
        %961 = vmatpush1.msra.mxu0 %v761
        %962 = vmatprep.subr.mxu0 %v764
        %963 = vmatpush1.msra.mxu0 %v763
        %964 = vmatprep.subr.mxu0 %v766
        %965 = vmatpush1.msra.mxu0 %v765
        %966 = vmatprep.subr.mxu0 %v768
        %967 = vmatpush1.msra.mxu0 %v767
        %968 = vmatprep.subr.mxu0 %v770
        %969 = vmatpush1.msra.mxu0 %v769
        %970 = vmatprep.subr.mxu0 %v772
        %971 = vmatpush1.msra.mxu0 %v771
        %972 = vmatprep.subr.mxu0 %v774
        %973 = vmatpush1.msra.mxu0 %v773
        %974 = vmatprep.subr.mxu0 %v776
        %975 = vmatpush1.msra.mxu0 %v775
        %976 = vmatprep.subr.mxu0 %v778
        %977 = vmatpush1.msra.mxu0 %v777
        %978 = vmatprep.subr.mxu0 %v780
        %979 = vmatpush1.msra.mxu0 %v779
        %980 = vmatprep.subr.mxu0 %v782
        %981 = vmatpush1.msra.mxu0 %v781
        %982 = vmatprep.subr.mxu0 %v784
        %983 = vmatpush1.msra.mxu0 %v783
        %984 = vmatprep.subr.mxu0 %v786
        %985 = vmatpush1.msra.mxu0 %v785
        %986 = vmatprep.subr.mxu0 %v788
        %987 = vmatpush1.msra.mxu0 %v787
        %988 = vmatprep.subr.mxu0 %v790
        %989 = vmatpush1.msra.mxu0 %v789
        %990 = vmatprep.subr.mxu0 %v792
        %991 = vmatpush1.msra.mxu0 %v791
        %992 = vmatprep.subr.mxu0 %v794
        %993 = vmatpush1.msra.mxu0 %v793
        %994 = vmatprep.subr.mxu0 %v796
        %995 = vmatpush1.msra.mxu0 %v795
        %996 = vmatprep.subr.mxu0 %v798
        %997 = vmatpush1.msra.mxu0 %v797
        %998 = vmatprep.subr.mxu0 %v800
        %999 = vmatpush1.msra.mxu0 %v799
        %1000 = vmatprep.subr.mxu0 %v802
        %1001 = vmatpush1.msra.mxu0 %v801
        %1002 = vmatprep.mubr.f32.mxu0 %v720
        %1003 = vmatmul.mubr.f32.gmra.mrb[0].mxu0 %v719
        %v1004 = vpop.f32.mrb[0].mxu0
        %v1005 = vadd.f32 %v934, %v1004
        %v1006 = vpop.f32.mrb[0].mxu0
        %v1007 = vadd.f32 %v936, %v1006
        %1008 = vdwg.mxu0
        %v1009 = vsub.f32 0.0, %v1005
        %v1010 = vsub.f32 0.0, %v1007
        %v1011 = vmul.f32 %v1009, 1.442695
        %v1012 = vpow.pop %v1011
        %v1013 = vmul.f32 %v1010, 1.442695
        %v1014 = vpow.pop %v1013
        %v1015 = vadd.f32 %v1012, 1.0
        %v1016 = vadd.f32 %v1014, 1.0
        %v1017 = vrcp.pop %v1015
        %v1018 = vmul.f32 1.0, %v1017
        %v1019 = vrcp.pop %v1016
        %v1020 = vmul.f32 1.0, %v1019
        %v1021 = vlaneseq
        %v1022 = vshrl.u32 %v1021, 7
        %v1023 = vsub.s32 0, %v1022
        %v1024 = vrot.slane %v1018, %v1023
        %v1025 = vlaneseq
        %v1026 = vshrl.u32 %v1025, 7
        %v1027 = vsub.s32 0, %v1026
        %v1028 = vrot.slane %v1020, %v1027
        %v1029 = vmul.f32 %v693, %v1024
        %v1030 = vmul.f32 %v694, %v1028
        %v1031 = vmul.f32 %v695, %v1024
        %v1032 = vmul.f32 %v696, %v1028
        %v1033 = vmul.f32 %v697, %v1024
        %v1034 = vmul.f32 %v698, %v1028
        %v1035 = vmul.f32 %v699, %v1024
        %v1036 = vmul.f32 %v700, %v1028
        %1037 = vst [vmem:[%s271] sm:$0xff] %v1029
        %1038 = vst [vmem:[%s271 + $0x8] sm:$0xff] %v1030
        %1039 = vst [vmem:[%s271 + $0x10] sm:$0xff] %v1031
        %1040 = vst [vmem:[%s271 + $0x18] sm:$0xff] %v1032
        %1041 = vst [vmem:[%s271 + $0x20] sm:$0xff] %v1033
        %1042 = vst [vmem:[%s271 + $0x28] sm:$0xff] %v1034
        %1043 = vst [vmem:[%s271 + $0x30] sm:$0xff] %v1035
        %1044 = vst [vmem:[%s271 + $0x38] sm:$0xff] %v1036
        %s1045 = sand.u32 %s141, 1
        %s1046 = scalar_lea.sflag [#allocation4], %s1045
        %s1047 = sand.u32 %s141, 1
        %s1048 = smul.addr %s1047, 64
        %s1049 = scalar_lea.vmem [#allocation8], %s1048
        // Predicated region
        $region53: #{tpu_custom_call.1} parent=39 // pred_check
          %p1050 = pneg %p151
        $region54: #{tpu_custom_call.1} parent=39 // pred_check_branch
          %1052 = sbr.rel (%p1050) target = $region56
        $region55: #{tpu_custom_call.1} parent=39 // pred_region
          %s1054 = ssub.s32 1024, 1024
          %1055 = vsyncadd %s1046, %s1054
          %s1056 = smul.addr %s23, 8
          %s1057 = smul.addr %s1056, 128
          %s1058 = scalar_lea.hbm %s5, %s1057
          %s1059 = sshll.u32 %s1049, 4
          %s1060 = int_to_ptr.vmem [resolvable:$true] %s1059
          %1065 = dma.vmem_to_hbm [thread:$0]  %s1060, 1024, %s1058, %s1046, 256, 256, 16
        $region56: #{tpu_custom_call.1} parent=39 // pred_fallthru
          _
      $region40: #{tpu_custom_call.1} parent=5 // pred_fallthru
        _
      %p1066 = scmp.le.s32.totalorder 2, %s18
      // Predicated region
      $region57: #{tpu_custom_call.1} parent=5 // pred_check
        %p1067 = pneg %p1066
      $region58: #{tpu_custom_call.1} parent=5 // pred_check_branch
        %1069 = sbr.rel (%p1067) target = $region60
      $region59: #{tpu_custom_call.1} parent=5 // pred_region
        %s1070 = ssub.s32 %s18, 2
        // Predicated region
        $region61: #{tpu_custom_call.1} parent=59 // pred_check
          %p1071 = pneg %p157
        $region62: #{tpu_custom_call.1} parent=59 // pred_check_branch
          %1073 = sbr.rel (%p1071) target = $region64
        $region63: #{tpu_custom_call.1} parent=59 // pred_region
          %s1074 = sand.u32 %s142, 1
          %s1075 = scalar_lea.sflag [#allocation4], %s1074
          %s1076 = sand.u32 %s142, 1
          %s1077 = smul.addr %s1076, 64
          %s1078 = scalar_lea.vmem [#allocation8], %s1077
          %1079 = dma.done %s1075, 1024
        $region64: #{tpu_custom_call.1} parent=59 // pred_fallthru
          _
      $region60: #{tpu_custom_call.1} parent=5 // pred_fallthru
        _
    $region6: #{tpu_custom_call.1} parent=1 // loop_footer
      %s22 = sadd.s32 1, %s18
    $region7: #{tpu_custom_call.1} parent=1 // loop_footer_branch
      %17 = sbr.rel target = $region3
    $region8: #{tpu_custom_call.1} parent=1 // loop_exit
      _
    %1080 = vsyncpa [#allocation3], 1
    %s1081 = scalar_lea.sflag [#allocation3], 1
    %1082 = vsyncpa %s1081, 1
    %1083 = vsyncpa [#allocation6], 1
    %1084 = vsyncpa [#allocation4], 1
    %s1085 = scalar_lea.sflag [#allocation4], 1
    %1086 = vsyncpa %s1085, 1

</llo_original>
